<compile_context>
chip_gen: v7x
topology: tpu7x:2x2x1
jax: 0.10.0
libtpu: 0.0.40
codegen_flags: <defaults>
</compile_context>

<pallas_src>
import jax
import jax.numpy as jnp
from jax.experimental import pallas as pl
from jax.experimental.pallas import tpu as pltpu


def _rope_kernel(xe_ref, xo_ref, cos_ref, sin_ref, o_ref):
    """One (row_block, seq_block) tile.

    xe_ref/xo_ref  : (RT, S_blk, Dh)    even / odd features (pre-de-interleaved)
    cos_ref/sin_ref: (S_blk, Dh)        float32 rotation cache for this seq block
    o_ref          : (RT, S_blk, 2*Dh)  output, half-split layout
    """
    dh = cos_ref.shape[-1]
    xe = xe_ref[...].astype(jnp.float32)
    xo = xo_ref[...].astype(jnp.float32)
    cos = cos_ref[...][None, :, :]
    sin = sin_ref[...][None, :, :]
    # Direct half-writes (no jnp.concatenate temporary).
    o_ref[:, :, :dh] = (xe * cos - xo * sin).astype(o_ref.dtype)
    o_ref[:, :, dh:] = (xe * sin + xo * cos).astype(o_ref.dtype)


def _choose_blocks(bh, s, dh, x_itemsize, out_itemsize, budget_bytes=8 * 2**20):
    """Pick (row_block, seq_block) so one buffer set (xe + xo + out) stays under
    budget_bytes; Pallas double-buffers, so real VMEM use is ~2x this + cos/sin."""
    per_pos = dh * (2 * x_itemsize + 2 * out_itemsize)  # xe + xo + out(2*Dh) per (row, seq pos)
    s_cap = max(8, budget_bytes // per_pos)
    if s <= s_cap:
        s_blk = s
    else:
        s_blk = min(2048, s_cap)
        s_blk = max(8, (s_blk // 8) * 8)
    rt = max(1, budget_bytes // (s_blk * per_pos))
    rt = min(rt, bh)
    if bh >= 2:
        # Keep >= 2 grid steps on the row axis so v7x's two TensorCores both work.
        rt = min(rt, max(1, bh // 2))
    return int(rt), int(s_blk)


def rope_forward(x: jax.Array, base: int = 10000) -> jax.Array:
    """Apply RoPE (same math + output layout as the PyTorch module) to x of shape (B, H, S, D)."""
    B, H, S, D = x.shape
    assert D % 2 == 0
    Dh = D // 2
    BH = B * H

    # Fixed cache (matches the module's _build_cache), kept in f32.
    inv_freq = 1.0 / (
        float(base) ** ((jnp.arange(1, Dh + 1, dtype=jnp.float32) - 1.0) * 2.0 / D)
    )                                                    # (Dh,)
    t = jnp.arange(S, dtype=jnp.float32)                 # (S,)
    emb = t[:, None] * inv_freq[None, :]                 # (S, Dh)
    cos = jnp.cos(emb)
    sin = jnp.sin(emb)

    # One-time de-interleave in XLA (amortized over the whole array) so the
    # kernel never does lane-stride-2 gathers.
    xp = x.reshape(BH, S, Dh, 2)
    x_even = xp[..., 0]                                  # (BH, S, Dh)
    x_odd = xp[..., 1]                                   # (BH, S, Dh)

    rt, s_blk = _choose_blocks(BH, S, Dh, x.dtype.itemsize, x.dtype.itemsize)
    grid = (pl.cdiv(S, s_blk), pl.cdiv(BH, rt))          # (seq blocks, row blocks)

    out2 = pl.pallas_call(
        _rope_kernel,
        out_shape=jax.ShapeDtypeStruct((BH, S, D), x.dtype),
        grid_spec=pltpu.PrefetchScalarGridSpec(
            num_scalar_prefetch=0,
            grid=grid,
            in_specs=[
                pl.BlockSpec((rt, s_blk, Dh), lambda s, r: (r, s, 0)),
                pl.BlockSpec((rt, s_blk, Dh), lambda s, r: (r, s, 0)),
                # cos/sin: constant block index along the fast (row) axis -> resident.
                pl.BlockSpec((s_blk, Dh), lambda s, r: (s, 0)),
                pl.BlockSpec((s_blk, Dh), lambda s, r: (s, 0)),
            ],
            out_specs=pl.BlockSpec((rt, s_blk, D), lambda s, r: (r, s, 0)),
        ),
        compiler_params=pltpu.CompilerParams(
            dimension_semantics=("parallel", "parallel"),
            vmem_limit_bytes=64 * 2**20,
        ),
    )(x_even, x_odd, cos, sin)

    # Metadata-only reshape back to the module's (B, H, S, D) layout.
    return out2.reshape(B, H, S, D)


def rope_reference(x: jax.Array, base: int = 10000) -> jax.Array:
    """Pure-JAX reference mirroring the PyTorch module exactly."""
    B, H, S, D = x.shape
    Dh = D // 2
    inv_freq = 1.0 / (
        float(base) ** ((jnp.arange(1, Dh + 1, dtype=jnp.float32) - 1.0) * 2.0 / D)
    )
    t = jnp.arange(S, dtype=jnp.float32)
    emb = t[:, None] * inv_freq[None, :]
    cos = jnp.cos(emb)[None, None]  # (1,1,S,Dh)
    sin = jnp.sin(emb)[None, None]
    x1 = x[..., 0::2]
    x2 = x[..., 1::2]
    return jnp.concatenate([x1 * cos - x2 * sin, x1 * sin + x2 * cos], axis=-1)


if __name__ == "__main__":
    key = jax.random.PRNGKey(0)

    # Small deterministic test, matching the module's layout (B, H, S, D).
    B, H, S, D = 2, 4, 8, 32
    x = jax.random.normal(key, (B, H, S, D), dtype=jnp.float32)
    out = jax.block_until_ready(rope_forward(x))
    ref = rope_reference(x)
    assert out.shape == (B, H, S, D)
    assert jnp.allclose(out, ref, atol=1e-5, rtol=1e-5), "f32 mismatch vs reference"

    # Slightly larger bf16 check to exercise the tiled, mixed-dtype path.
    xb = jax.random.normal(jax.random.PRNGKey(1), (2, 8, 512, 64), dtype=jnp.bfloat16)
    outb = jax.block_until_ready(rope_forward(xb))
    refb = rope_reference(xb.astype(jnp.float32))
    assert jnp.allclose(outb.astype(jnp.float32), refb, atol=5e-2, rtol=5e-2), "bf16 mismatch"

    print("KERNEL_OK")
</pallas_src>

<mosaic_0001>
module attributes {stable_mosaic.version = 11 : i64} {
  func.func @_rope_kernel(%arg0: i32, %arg1: i32, %arg2: memref<4x8x16xf32, #tpu.memory_space<vmem>>, %arg3: memref<4x8x16xf32, #tpu.memory_space<vmem>>, %arg4: memref<8x16xf32, #tpu.memory_space<vmem>>, %arg5: memref<8x16xf32, #tpu.memory_space<vmem>>, %arg6: memref<4x8x32xf32, #tpu.memory_space<vmem>>) attributes {dimension_semantics = [#tpu.dimension_semantics<parallel>, #tpu.dimension_semantics<parallel>], iteration_bounds = array<i64: 1, 2>, scalar_prefetch = 0 : i64, scratch_operands = 0 : i64, tpu.core_type = #tpu.core_type<tc>, window_params = [{transform_indices = @transform_0, window_bounds = array<i64: 4, 8, 16>}, {transform_indices = @transform_1, window_bounds = array<i64: 4, 8, 16>}, {transform_indices = @transform_2, window_bounds = array<i64: 8, 16>}, {transform_indices = @transform_3, window_bounds = array<i64: 8, 16>}, {transform_indices = @transform_4, window_bounds = array<i64: 4, 8, 32>}]} {
    %c0 = arith.constant 0 : index
    %c0_0 = arith.constant 0 : index
    %c0_1 = arith.constant 0 : index
    %0 = vector.load %arg2[%c0, %c0_0, %c0_1] : memref<4x8x16xf32, #tpu.memory_space<vmem>>, vector<4x8x16xf32>
    %c0_2 = arith.constant 0 : index
    %c0_3 = arith.constant 0 : index
    %c0_4 = arith.constant 0 : index
    %1 = vector.load %arg3[%c0_2, %c0_3, %c0_4] : memref<4x8x16xf32, #tpu.memory_space<vmem>>, vector<4x8x16xf32>
    %c0_5 = arith.constant 0 : index
    %c0_6 = arith.constant 0 : index
    %2 = vector.load %arg4[%c0_5, %c0_6] : memref<8x16xf32, #tpu.memory_space<vmem>>, vector<8x16xf32>
    %3 = vector.shape_cast %2 : vector<8x16xf32> to vector<1x8x16xf32>
    %c0_7 = arith.constant 0 : index
    %c0_8 = arith.constant 0 : index
    %4 = vector.load %arg5[%c0_7, %c0_8] : memref<8x16xf32, #tpu.memory_space<vmem>>, vector<8x16xf32>
    %5 = vector.shape_cast %4 : vector<8x16xf32> to vector<1x8x16xf32>
    %6 = vector.broadcast %3 : vector<1x8x16xf32> to vector<4x8x16xf32>
    %7 = arith.mulf %0, %6 : vector<4x8x16xf32>
    %8 = vector.broadcast %5 : vector<1x8x16xf32> to vector<4x8x16xf32>
    %9 = arith.mulf %1, %8 : vector<4x8x16xf32>
    %10 = arith.subf %7, %9 : vector<4x8x16xf32>
    %c0_9 = arith.constant 0 : index
    %c0_10 = arith.constant 0 : index
    %c0_11 = arith.constant 0 : index
    %11 = vector.load %arg6[%c0_9, %c0_10, %c0_11] : memref<4x8x32xf32, #tpu.memory_space<vmem>>, vector<4x8x16xf32>
    tpu.vector_store %arg6[%c0_9, %c0_10, %c0_11], %10 {strides = array<i32>} : memref<4x8x32xf32, #tpu.memory_space<vmem>>, vector<4x8x16xf32>,
    %12 = vector.broadcast %5 : vector<1x8x16xf32> to vector<4x8x16xf32>
    %13 = arith.mulf %0, %12 : vector<4x8x16xf32>
    %14 = vector.broadcast %3 : vector<1x8x16xf32> to vector<4x8x16xf32>
    %15 = arith.mulf %1, %14 : vector<4x8x16xf32>
    %16 = arith.addf %13, %15 : vector<4x8x16xf32>
    %c0_12 = arith.constant 0 : index
    %c0_13 = arith.constant 0 : index
    %c16 = arith.constant 16 : index
    %17 = vector.load %arg6[%c0_12, %c0_13, %c16] : memref<4x8x32xf32, #tpu.memory_space<vmem>>, vector<4x8x16xf32>
    tpu.vector_store %arg6[%c0_12, %c0_13, %c16], %16 {strides = array<i32>} : memref<4x8x32xf32, #tpu.memory_space<vmem>>, vector<4x8x16xf32>,
    return
  }
  func.func @transform_0(%arg0: i32, %arg1: i32) -> (i32, i32, i32) {
    %c0_i32 = arith.constant 0 : i32
    %c0_i32_0 = arith.constant 0 : i32
    return %arg1, %arg0, %c0_i32 : i32, i32, i32
  }
  func.func @transform_1(%arg0: i32, %arg1: i32) -> (i32, i32, i32) {
    %c0_i32 = arith.constant 0 : i32
    %c0_i32_0 = arith.constant 0 : i32
    return %arg1, %arg0, %c0_i32 : i32, i32, i32
  }
  func.func @transform_2(%arg0: i32, %arg1: i32) -> (i32, i32) {
    %c0_i32 = arith.constant 0 : i32
    %c0_i32_0 = arith.constant 0 : i32
    return %arg0, %c0_i32 : i32, i32
  }
  func.func @transform_3(%arg0: i32, %arg1: i32) -> (i32, i32) {
    %c0_i32 = arith.constant 0 : i32
    %c0_i32_0 = arith.constant 0 : i32
    return %arg0, %c0_i32 : i32, i32
  }
  func.func @transform_4(%arg0: i32, %arg1: i32) -> (i32, i32, i32) {
    %c0_i32 = arith.constant 0 : i32
    %c0_i32_0 = arith.constant 0 : i32
    return %arg1, %arg0, %c0_i32 : i32, i32, i32
  }
}

</mosaic_0001>

<llo_original>
// kernel: tpu_custom_call.1
$region0: #{tpu_custom_call.1}
  #allocation0 [shape = 'u32[]', space=smem, size = 0x4, offset = 0x4, fixed_abs, tag = 'smem constant byte address 0x4 - core index']
  #allocation1 [shape = 'u32[144,128]{1,0:T(1,128)}', space=vmem, size = 0x12000, scoped, tag = 'internal scratch']
  %s0 = inlined_call_operand.hbm [shape: f32[8,8,16], index: 0, kind: input, shape index: {}]
  %s1 = inlined_call_operand.hbm [shape: f32[8,8,16], index: 1, kind: input, shape index: {}]
  %s2 = inlined_call_operand.hbm [shape: f32[8,16], index: 2, kind: input, shape index: {}]
  %s3 = inlined_call_operand.hbm [shape: f32[8,16], index: 3, kind: input, shape index: {}]
  %s4 = inlined_call_operand.hbm [shape: f32[8,8,32], index: 4, kind: output, shape index: {}]
  %s5 = sld [smem:[#allocation0]]
  $region65: #{tpu_custom_call.1} parent=0
    _
  %s7 = ssub.s32 1, %s5
  %s8 = scalar_select 0, %s7, %s5
  $region1: #{tpu_custom_call.1} parent=0
    #allocation2 [shape = 'u8[32768]{0}', space=vmem, size = 0x8000, scoped, tag = 'input window, operand 0']
    #allocation3 [shape = 's32[2]{0}', space=sflag, size = 0x8, scoped, tag = 'scoped memory for tpu_custom_call.1']
    #allocation4 [shape = 's32[2]{0}', space=sflag, size = 0x8, scoped, tag = 'scoped memory for tpu_custom_call.1']
    #allocation5 [shape = 'u8[32768]{0}', space=vmem, size = 0x8000, scoped, tag = 'input window, operand 1']
    #allocation6 [shape = 's32[2]{0}', space=sflag, size = 0x8, scoped, tag = 'scoped memory for tpu_custom_call.1']
    #allocation7 [shape = 'u8[4096]{0}', space=vmem, size = 0x1000, scoped, tag = 'input window, operand 2, single buffered']
    #allocation8 [shape = 'u8[4096]{0}', space=vmem, size = 0x1000, scoped, tag = 'input window, operand 3, single buffered']
    #allocation9 [shape = 's32[1]{0}', space=sflag, size = 0x4, scoped, tag = 'scoped memory for tpu_custom_call.1']
    #allocation10 [shape = 'u8[32768]{0}', space=vmem, size = 0x8000, scoped, tag = 'output window, operand 0']
    %9 = vsyncpa [#allocation3], 0
    %s10 = scalar_lea.sflag [#allocation3], 1
    %11 = vsyncpa %s10, 0
    %12 = vsyncpa [#allocation6], 0
    %s13 = scalar_lea.sflag [#allocation6], 1
    %14 = vsyncpa %s13, 0
    %15 = vsyncpa [#allocation9], 0
    %16 = vsyncpa [#allocation4], 0
    %s17 = scalar_lea.sflag [#allocation4], 1
    %18 = vsyncpa %s17, 0
    loop: start=0, step=1, limit=4
    $region2: #{tpu_custom_call.1} parent=1 // loop_pre_header
      _
    $region3: #{tpu_custom_call.1} parent=1 // loop_header
      %s20 = sphi 0, %s24
      %p21 = scmp.ge.s32.totalorder %s20, 4
      %s27 = sphi 0, %s39
      %s28 = sphi 0, %s35
      %s29 = sphi 0, %s27
      %s30 = sphi 0, %s28
      %s31 = sphi 0, %s29
      %s32 = sphi 0, %s30
      %s44 = sphi 0, %s46
      %s47 = sphi 0, %s44
      %s48 = sphi 0, %s47
      %s64 = sphi 0, %s48
      %s72 = sphi 0, %s74
      %s75 = sphi 0, %s72
      %s76 = sphi 0, %s75
      %s92 = sphi 0, %s76
      %s98 = sphi 0, %s100
      %s101 = sphi 0, %s98
      %s102 = sphi 0, %s101
      %s118 = sphi 0, %s102
      %s124 = sphi 0, %s126
      %s127 = sphi 0, %s124
      %s128 = sphi 0, %s127
      %s144 = sphi 0, %s128
      %s152 = sphi 0, %s154
      %s155 = sphi 0, %s152
      %s156 = sphi 0, %s155
      %s172 = sphi 0, %s156
    $region4: #{tpu_custom_call.1} parent=1 // loop_header_branch
      %23 = sbr.rel (%p21) target = $region8
    $region5: #{tpu_custom_call.1} parent=1 // loop_body
      %s25 = ssub.s32 %s20, 1
      %s26 = ssub.s32 %s20, 2
      %s33 = sadd.s32 1, %s28
      %p34 = scmp.ge.s32.totalorder %s33, 2
      %s35 = scalar_select %p34, 0, %s33
      %s36 = sadd.s32 1, %s27
      %s37 = scalar_select %p34, %s36, %s27
      %p38 = scmp.ge.s32.totalorder %s37, 1
      %s39 = scalar_select %p38, 0, %s37
      %s40 = ssub.s32 %s28, %s35
      %s41 = ssub.s32 %s27, %s39
      %s42 = sor.u32 %s40, %s41
      %p43 = scmp.eq.s32.totalorder %s42, 0
      %s45 = sadd.s32 %s44, 1
      %s46 = scalar_select %p43, %s44, %s45
      %p49 = pneg %p43
      %p50 = scmp.eq.s32.totalorder %s20, 1
      %p51 = por %p49, %p50
      %p52 = scmp.ne.s32.totalorder %s44, %s47
      %p53 = scmp.eq.s32.totalorder %s20, 0
      %p54 = por %p52, %p53
      %p55 = scmp.ne.s32.totalorder %s44, %s47
      %p56 = scmp.eq.s32.totalorder %s25, 1
      %p57 = por %p55, %p56
      %p58 = scmp.ne.s32.totalorder %s47, %s48
      %p59 = scmp.eq.s32.totalorder %s25, 0
      %p60 = por %p58, %p59
      %p61 = scmp.ne.s32.totalorder %s47, %s48
      %p62 = scmp.eq.s32.totalorder %s26, 1
      %p63 = por %p61, %p62
      %p65 = scmp.ne.s32.totalorder %s48, %s64
      %p66 = scmp.eq.s32.totalorder %s26, 0
      %p67 = por %p65, %p66
      %s68 = ssub.s32 %s28, %s35
      %s69 = ssub.s32 %s27, %s39
      %s70 = sor.u32 %s68, %s69
      %p71 = scmp.eq.s32.totalorder %s70, 0
      %s73 = sadd.s32 %s72, 1
      %s74 = scalar_select %p71, %s72, %s73
      %p77 = pneg %p71
      %p78 = scmp.eq.s32.totalorder %s20, 1
      %p79 = por %p77, %p78
      %p80 = scmp.ne.s32.totalorder %s72, %s75
      %p81 = scmp.eq.s32.totalorder %s20, 0
      %p82 = por %p80, %p81
      %p83 = scmp.ne.s32.totalorder %s72, %s75
      %p84 = scmp.eq.s32.totalorder %s25, 1
      %p85 = por %p83, %p84
      %p86 = scmp.ne.s32.totalorder %s75, %s76
      %p87 = scmp.eq.s32.totalorder %s25, 0
      %p88 = por %p86, %p87
      %p89 = scmp.ne.s32.totalorder %s75, %s76
      %p90 = scmp.eq.s32.totalorder %s26, 1
      %p91 = por %p89, %p90
      %p93 = scmp.ne.s32.totalorder %s76, %s92
      %p94 = scmp.eq.s32.totalorder %s26, 0
      %p95 = por %p93, %p94
      %s96 = ssub.s32 %s27, %s39
      %p97 = scmp.eq.s32.totalorder %s96, 0
      %s99 = sadd.s32 %s98, 1
      %s100 = scalar_select %p97, %s98, %s99
      %p103 = pneg %p97
      %p104 = scmp.eq.s32.totalorder %s20, 1
      %p105 = por %p103, %p104
      %p106 = scmp.ne.s32.totalorder %s98, %s101
      %p107 = scmp.eq.s32.totalorder %s20, 0
      %p108 = por %p106, %p107
      %p109 = scmp.ne.s32.totalorder %s98, %s101
      %p110 = scmp.eq.s32.totalorder %s25, 1
      %p111 = por %p109, %p110
      %p112 = scmp.ne.s32.totalorder %s101, %s102
      %p113 = scmp.eq.s32.totalorder %s25, 0
      %p114 = por %p112, %p113
      %p115 = scmp.ne.s32.totalorder %s101, %s102
      %p116 = scmp.eq.s32.totalorder %s26, 1
      %p117 = por %p115, %p116
      %p119 = scmp.ne.s32.totalorder %s102, %s118
      %p120 = scmp.eq.s32.totalorder %s26, 0
      %p121 = por %p119, %p120
      %s122 = ssub.s32 %s27, %s39
      %p123 = scmp.eq.s32.totalorder %s122, 0
      %s125 = sadd.s32 %s124, 1
      %s126 = scalar_select %p123, %s124, %s125
      %p129 = pneg %p123
      %p130 = scmp.eq.s32.totalorder %s20, 1
      %p131 = por %p129, %p130
      %p132 = scmp.ne.s32.totalorder %s124, %s127
      %p133 = scmp.eq.s32.totalorder %s20, 0
      %p134 = por %p132, %p133
      %p135 = scmp.ne.s32.totalorder %s124, %s127
      %p136 = scmp.eq.s32.totalorder %s25, 1
      %p137 = por %p135, %p136
      %p138 = scmp.ne.s32.totalorder %s127, %s128
      %p139 = scmp.eq.s32.totalorder %s25, 0
      %p140 = por %p138, %p139
      %p141 = scmp.ne.s32.totalorder %s127, %s128
      %p142 = scmp.eq.s32.totalorder %s26, 1
      %p143 = por %p141, %p142
      %p145 = scmp.ne.s32.totalorder %s128, %s144
      %p146 = scmp.eq.s32.totalorder %s26, 0
      %p147 = por %p145, %p146
      %s148 = ssub.s32 %s28, %s35
      %s149 = ssub.s32 %s27, %s39
      %s150 = sor.u32 %s148, %s149
      %p151 = scmp.eq.s32.totalorder %s150, 0
      %s153 = sadd.s32 %s152, 1
      %s154 = scalar_select %p151, %s152, %s153
      %p157 = pneg %p151
      %p158 = scmp.eq.s32.totalorder %s20, 1
      %p159 = por %p157, %p158
      %p160 = scmp.ne.s32.totalorder %s152, %s155
      %p161 = scmp.eq.s32.totalorder %s20, 0
      %p162 = por %p160, %p161
      %p163 = scmp.ne.s32.totalorder %s152, %s155
      %p164 = scmp.eq.s32.totalorder %s25, 1
      %p165 = por %p163, %p164
      %p166 = scmp.ne.s32.totalorder %s155, %s156
      %p167 = scmp.eq.s32.totalorder %s25, 0
      %p168 = por %p166, %p167
      %p169 = scmp.ne.s32.totalorder %s155, %s156
      %p170 = scmp.eq.s32.totalorder %s26, 1
      %p171 = por %p169, %p170
      %p173 = scmp.ne.s32.totalorder %s156, %s172
      %p174 = scmp.eq.s32.totalorder %s26, 0
      %p175 = por %p173, %p174
      %p176 = scmp.le.s32.totalorder 1, %s20
      %p177 = scmp.lt.s32.totalorder %s20, 3
      %p178 = pnand %p176, %p177
      %p179 = pneg %p178
      // Predicated region
      $region9: #{tpu_custom_call.1} parent=5 // pred_check
        _
      $region10: #{tpu_custom_call.1} parent=5 // pred_check_branch
        %181 = sbr.rel (%p178) target = $region12
      $region11: #{tpu_custom_call.1} parent=5 // pred_region
        %s182 = ssub.s32 %s20, 1
        // Predicated region
        $region13: #{tpu_custom_call.1} parent=11 // pred_check
          %p183 = pneg %p114
        $region14: #{tpu_custom_call.1} parent=11 // pred_check_branch
          %185 = sbr.rel (%p183) target = $region16
        $region15: #{tpu_custom_call.1} parent=11 // pred_region
          %s187 = ssub.s32 128, 128
          %188 = vsyncadd [#allocation6], %s187
          %s189 = smul.addr %s29, 128
          %s190 = scalar_lea.hbm %s2, %s189
          %s192 = sshll.u32 [#allocation7], 4
          %s193 = int_to_ptr.vmem [resolvable:$true] %s192
          %195 = dma.hbm_to_vmem [thread:$0]  %s190, 128, %s193, [#allocation6]
        $region16: #{tpu_custom_call.1} parent=11 // pred_fallthru
          _
        // Predicated region
        $region17: #{tpu_custom_call.1} parent=11 // pred_check
          %p196 = pneg %p140
        $region18: #{tpu_custom_call.1} parent=11 // pred_check_branch
          %198 = sbr.rel (%p196) target = $region20
        $region19: #{tpu_custom_call.1} parent=11 // pred_region
          %s200 = ssub.s32 128, 128
          %201 = vsyncadd [#allocation9], %s200
          %s202 = smul.addr %s29, 128
          %s203 = scalar_lea.hbm %s3, %s202
          %s205 = sshll.u32 [#allocation8], 4
          %s206 = int_to_ptr.vmem [resolvable:$true] %s205
          %208 = dma.hbm_to_vmem [thread:$0]  %s203, 128, %s206, [#allocation9]
        $region20: #{tpu_custom_call.1} parent=11 // pred_fallthru
          _
      $region12: #{tpu_custom_call.1} parent=5 // pred_fallthru
        _
      %p209 = scmp.lt.s32.totalorder %s20, 2
      // Predicated region
      $region21: #{tpu_custom_call.1} parent=5 // pred_check
        %p210 = pneg %p209
      $region22: #{tpu_custom_call.1} parent=5 // pred_check_branch
        %212 = sbr.rel (%p210) target = $region24
      $region23: #{tpu_custom_call.1} parent=5 // pred_region
        // Predicated region
        $region25: #{tpu_custom_call.1} parent=23 // pred_check
          %p213 = pneg %p54
        $region26: #{tpu_custom_call.1} parent=23 // pred_check_branch
          %215 = sbr.rel (%p213) target = $region28
        $region27: #{tpu_custom_call.1} parent=23 // pred_region
          %s216 = sand.u32 %s44, 1
          %s217 = scalar_lea.sflag [#allocation3], %s216
          %s218 = sand.u32 %s44, 1
          %s219 = smul.addr %s218, 32
          %s220 = scalar_lea.vmem [#allocation2], %s219
          %s221 = smul.u32 4, %s28
          %s223 = ssub.s32 512, 512
          %224 = vsyncadd %s217, %s223
          %s225 = sadd.s32 %s27, %s221
          %s226 = smul.addr %s225, 128
          %s227 = scalar_lea.hbm %s0, %s226
          %s228 = sshll.u32 %s220, 4
          %s229 = int_to_ptr.vmem [resolvable:$true] %s228
          %234 = dma.hbm_to_vmem [thread:$0]  %s227, 512, %s229, %s217, 128, 128, 8
        $region28: #{tpu_custom_call.1} parent=23 // pred_fallthru
          _
        // Predicated region
        $region29: #{tpu_custom_call.1} parent=23 // pred_check
          %p235 = pneg %p82
        $region30: #{tpu_custom_call.1} parent=23 // pred_check_branch
          %237 = sbr.rel (%p235) target = $region32
        $region31: #{tpu_custom_call.1} parent=23 // pred_region
          %s238 = sand.u32 %s20, 1
          %s239 = scalar_lea.sflag [#allocation6], %s238
          %s240 = sand.u32 %s72, 1
          %s241 = smul.addr %s240, 32
          %s242 = scalar_lea.vmem [#allocation5], %s241
          %s243 = smul.u32 4, %s28
          %s245 = ssub.s32 512, 512
          %246 = vsyncadd %s239, %s245
          %s247 = sadd.s32 %s27, %s243
          %s248 = smul.addr %s247, 128
          %s249 = scalar_lea.hbm %s1, %s248
          %s250 = sshll.u32 %s242, 4
          %s251 = int_to_ptr.vmem [resolvable:$true] %s250
          %256 = dma.hbm_to_vmem [thread:$0]  %s249, 512, %s251, %s239, 128, 128, 8
        $region32: #{tpu_custom_call.1} parent=23 // pred_fallthru
          _
      $region24: #{tpu_custom_call.1} parent=5 // pred_fallthru
        _
      %p257 = scmp.le.s32.totalorder 1, %s20
      %p258 = scmp.lt.s32.totalorder %s20, 3
      %p259 = pnand %p257, %p258
      %p260 = pneg %p259
      // Predicated region
      $region33: #{tpu_custom_call.1} parent=5 // pred_check
        _
      $region34: #{tpu_custom_call.1} parent=5 // pred_check_branch
        %262 = sbr.rel (%p259) target = $region36
      $region35: #{tpu_custom_call.1} parent=5 // pred_region
        %s263 = ssub.s32 %s20, 1
        %s264 = sand.u32 %s47, 1
        %s265 = scalar_lea.sflag [#allocation3], %s264
        %s266 = sand.u32 %s47, 1
        %s267 = smul.addr %s266, 32
        %s268 = scalar_lea.vmem [#allocation2], %s267
        // Predicated region
        $region37: #{tpu_custom_call.1} parent=35 // pred_check
          %p269 = pneg %p60
        $region38: #{tpu_custom_call.1} parent=35 // pred_check_branch
          %271 = sbr.rel (%p269) target = $region40
        $region39: #{tpu_custom_call.1} parent=35 // pred_region
          %272 = dma.done %s265, 512
        $region40: #{tpu_custom_call.1} parent=35 // pred_fallthru
          _
        %s273 = sand.u32 %s25, 1
        %s274 = scalar_lea.sflag [#allocation6], %s273
        %s275 = sand.u32 %s75, 1
        %s276 = smul.addr %s275, 32
        %s277 = scalar_lea.vmem [#allocation5], %s276
        // Predicated region
        $region41: #{tpu_custom_call.1} parent=35 // pred_check
          %p278 = pneg %p88
        $region42: #{tpu_custom_call.1} parent=35 // pred_check_branch
          %280 = sbr.rel (%p278) target = $region44
        $region43: #{tpu_custom_call.1} parent=35 // pred_region
          %281 = dma.done %s274, 512
        $region44: #{tpu_custom_call.1} parent=35 // pred_fallthru
          _
        // Predicated region
        $region45: #{tpu_custom_call.1} parent=35 // pred_check
          %p282 = pneg %p114
        $region46: #{tpu_custom_call.1} parent=35 // pred_check_branch
          %284 = sbr.rel (%p282) target = $region48
        $region47: #{tpu_custom_call.1} parent=35 // pred_region
          %285 = dma.done [#allocation6], 128
        $region48: #{tpu_custom_call.1} parent=35 // pred_fallthru
          _
        // Predicated region
        $region49: #{tpu_custom_call.1} parent=35 // pred_check
          %p286 = pneg %p140
        $region50: #{tpu_custom_call.1} parent=35 // pred_check_branch
          %288 = sbr.rel (%p286) target = $region52
        $region51: #{tpu_custom_call.1} parent=35 // pred_region
          %289 = dma.done [#allocation9], 128
        $region52: #{tpu_custom_call.1} parent=35 // pred_fallthru
          _
        %s290 = sand.u32 %s47, 1
        %s291 = scalar_lea.sflag [#allocation3], %s290
        %s292 = sand.u32 %s47, 1
        %s293 = smul.addr %s292, 32
        %s294 = scalar_lea.vmem [#allocation2], %s293
        %p295 = pneg %p60
        %p296 = pneg %p57
        %s297 = sand.u32 %s25, 1
        %s298 = scalar_lea.sflag [#allocation6], %s297
        %s299 = sand.u32 %s75, 1
        %s300 = smul.addr %s299, 32
        %s301 = scalar_lea.vmem [#allocation5], %s300
        %p302 = pneg %p88
        %p303 = pneg %p85
        %p304 = pneg %p114
        %p305 = pneg %p111
        %p306 = pneg %p140
        %p307 = pneg %p137
        %p308 = pneg %p168
        %p309 = pneg %p165
        %s310 = sand.u32 %s155, 1
        %s311 = scalar_lea.sflag [#allocation4], %s310
        %s312 = sand.u32 %s155, 1
        %s313 = smul.addr %s312, 32
        %s314 = scalar_lea.vmem [#allocation10], %s313
        %s315 = smul.u32 4, %s30
        %s316 = smul.u32 4, %s30
        %s317 = smul.u32 4, %s30
        %v318 = vld [vmem:[%s268] sm:$0xff]
        %v319 = vld [vmem:[%s268 + $0x8] sm:$0xff]
        %v320 = vld [vmem:[%s268 + $0x10] sm:$0xff]
        %v321 = vld [vmem:[%s268 + $0x18] sm:$0xff]
        %v322 = vld [vmem:[%s277] sm:$0xff]
        %v323 = vld [vmem:[%s277 + $0x8] sm:$0xff]
        %v324 = vld [vmem:[%s277 + $0x10] sm:$0xff]
        %v325 = vld [vmem:[%s277 + $0x18] sm:$0xff]
        %v326 = vld [vmem:[#allocation7] sm:$0xff]
        %v327 = vld [vmem:[#allocation8] sm:$0xff]
        %v328 = vmul.f32 %v318, %v326
        %v329 = vmul.f32 %v319, %v326
        %v330 = vmul.f32 %v320, %v326
        %v331 = vmul.f32 %v321, %v326
        %v332 = vmul.f32 %v322, %v327
        %v333 = vmul.f32 %v323, %v327
        %v334 = vmul.f32 %v324, %v327
        %v335 = vmul.f32 %v325, %v327
        %v336 = vsub.f32 %v328, %v332
        %v337 = vsub.f32 %v329, %v333
        %v338 = vsub.f32 %v330, %v334
        %v339 = vsub.f32 %v331, %v335
        %vm340 = vcmask 130048
        %341 = vst.msk [vmem:[%s314] sm:$0xff] %vm340, %v336
        %342 = vst.msk [vmem:[%s314 + $0x8] sm:$0xff] %vm340, %v337
        %343 = vst.msk [vmem:[%s314 + $0x10] sm:$0xff] %vm340, %v338
        %344 = vst.msk [vmem:[%s314 + $0x18] sm:$0xff] %vm340, %v339
        %v345 = vmul.f32 %v318, %v327
        %v346 = vmul.f32 %v319, %v327
        %v347 = vmul.f32 %v320, %v327
        %v348 = vmul.f32 %v321, %v327
        %v349 = vmul.f32 %v322, %v326
        %v350 = vmul.f32 %v323, %v326
        %v351 = vmul.f32 %v324, %v326
        %v352 = vmul.f32 %v325, %v326
        %v353 = vadd.f32 %v345, %v349
        %v354 = vadd.f32 %v346, %v350
        %v355 = vadd.f32 %v347, %v351
        %v356 = vadd.f32 %v348, %v352
        %361 = vrot.lane.b32.xlu0 %v353, 16
        %v362 = vpop.permute.xlu0 %361
        %363 = vrot.lane.b32.xlu0 %v354, 16
        %v364 = vpop.permute.xlu0 %363
        %365 = vrot.lane.b32.xlu0 %v355, 16
        %v366 = vpop.permute.xlu0 %365
        %367 = vrot.lane.b32.xlu0 %v356, 16
        %v368 = vpop.permute.xlu0 %367
        %vm373 = vcmask 261248
        %374 = vst.msk [vmem:[%s314] sm:$0xff] %vm373, %v362
        %375 = vst.msk [vmem:[%s314 + $0x8] sm:$0xff] %vm373, %v364
        %376 = vst.msk [vmem:[%s314 + $0x10] sm:$0xff] %vm373, %v366
        %377 = vst.msk [vmem:[%s314 + $0x18] sm:$0xff] %vm373, %v368
        %s378 = sand.u32 %s155, 1
        %s379 = scalar_lea.sflag [#allocation4], %s378
        %s380 = sand.u32 %s155, 1
        %s381 = smul.addr %s380, 32
        %s382 = scalar_lea.vmem [#allocation10], %s381
        // Predicated region
        $region53: #{tpu_custom_call.1} parent=35 // pred_check
          %p383 = pneg %p165
        $region54: #{tpu_custom_call.1} parent=35 // pred_check_branch
          %385 = sbr.rel (%p383) target = $region56
        $region55: #{tpu_custom_call.1} parent=35 // pred_region
          %s386 = smul.u32 4, %s30
          %s388 = ssub.s32 512, 512
          %389 = vsyncadd %s379, %s388
          %s390 = sadd.s32 %s29, %s386
          %s391 = smul.addr %s390, 128
          %s392 = scalar_lea.hbm %s4, %s391
          %s393 = sshll.u32 %s382, 4
          %s394 = int_to_ptr.vmem [resolvable:$true] %s393
          %399 = dma.vmem_to_hbm [thread:$0]  %s394, 512, %s392, %s379, 128, 128, 8
        $region56: #{tpu_custom_call.1} parent=35 // pred_fallthru
          _
      $region36: #{tpu_custom_call.1} parent=5 // pred_fallthru
        _
      %p400 = scmp.le.s32.totalorder 2, %s20
      // Predicated region
      $region57: #{tpu_custom_call.1} parent=5 // pred_check
        %p401 = pneg %p400
      $region58: #{tpu_custom_call.1} parent=5 // pred_check_branch
        %403 = sbr.rel (%p401) target = $region60
      $region59: #{tpu_custom_call.1} parent=5 // pred_region
        %s404 = ssub.s32 %s20, 2
        // Predicated region
        $region61: #{tpu_custom_call.1} parent=59 // pred_check
          %p405 = pneg %p171
        $region62: #{tpu_custom_call.1} parent=59 // pred_check_branch
          %407 = sbr.rel (%p405) target = $region64
        $region63: #{tpu_custom_call.1} parent=59 // pred_region
          %s408 = sand.u32 %s156, 1
          %s409 = scalar_lea.sflag [#allocation4], %s408
          %s410 = sand.u32 %s156, 1
          %s411 = smul.addr %s410, 32
          %s412 = scalar_lea.vmem [#allocation10], %s411
          %413 = dma.done %s409, 512
        $region64: #{tpu_custom_call.1} parent=59 // pred_fallthru
          _
      $region60: #{tpu_custom_call.1} parent=5 // pred_fallthru
        _
    $region6: #{tpu_custom_call.1} parent=1 // loop_footer
      %s24 = sadd.s32 1, %s20
    $region7: #{tpu_custom_call.1} parent=1 // loop_footer_branch
      %19 = sbr.rel target = $region3
    $region8: #{tpu_custom_call.1} parent=1 // loop_exit
      _
    %414 = vsyncpa [#allocation3], 1
    %s415 = scalar_lea.sflag [#allocation3], 1
    %416 = vsyncpa %s415, 1
    %417 = vsyncpa [#allocation6], 1
    %s418 = scalar_lea.sflag [#allocation6], 1
    %419 = vsyncpa %s418, 1
    %420 = vsyncpa [#allocation9], 1
    %421 = vsyncpa [#allocation4], 1
    %s422 = scalar_lea.sflag [#allocation4], 1
    %423 = vsyncpa %s422, 1

</llo_original>
